<compile_context>
chip_gen: v7x
topology: tpu7x:2x2x1
jax: 0.10.0
libtpu: 0.0.40
codegen_flags: <defaults>
</compile_context>

<pallas_src>
import jax
import jax.numpy as jnp
from jax.experimental import pallas as pl
from jax.experimental.pallas import tpu as pltpu


_PALLAS_MIN_ELEMENTS = 1 << 15   # below this, XLA's fused elementwise op wins


def _fusion_kernel(coef_ref, cost_ref, sim_ref, dyn_ref, out_ref):
    # coef_ref: (3,) float32 in SMEM (scalar prefetch) = [a, b, c].
    # cost_ref / sim_ref: (1, TL) blocks of the flattened static matrices.
    # dyn_ref / out_ref: (TB, TL) blocks of the flattened dynamic matrix / output.
    a = coef_ref[0]
    b = coef_ref[1]
    c = coef_ref[2]
    acc = (a * cost_ref[...].astype(jnp.float32)
           + c * sim_ref[...].astype(jnp.float32)
           + b * dyn_ref[...].astype(jnp.float32))
    out_ref[...] = acc.astype(out_ref.dtype)


def _tpu_params():
    """(physical VMEM bytes, TensorCores per chip) with conservative fallbacks."""
    vmem_cap = 64 * 1024 * 1024   # conservative: v7x has the smallest VMEM
    num_cores = 1
    try:
        info = pltpu.get_tpu_info()
    except Exception:
        info = None
    if info is not None:
        cap = getattr(info, "vmem_capacity_bytes", None)
        if cap:
            vmem_cap = int(cap)
        for name in ("num_cores", "core_count", "num_tensorcores",
                     "tensorcores_per_chip"):
            v = getattr(info, name, None)
            if isinstance(v, int) and v > 0:
                num_cores = v
                break
    return vmem_cap, num_cores


def _sublane_granularity(itemsize):
    # Native packed tile: (8,128) f32, (16,128) bf16, (32,128) int8/fp8.
    return max(8, 32 // max(1, itemsize))


def _footprint_bytes(tb, tl, dyn_size, out_size, cost_size, sim_size):
    """Real per-step VMEM footprint: double-buffered dyn/out blocks plus the
    double-buffered (1, TL) cost/sim blocks, which are physically padded to the
    dtype's native sublane count."""
    dyn_bytes = 2 * tb * tl * dyn_size
    out_bytes = 2 * tb * tl * out_size
    cost_bytes = 2 * _sublane_granularity(cost_size) * tl * cost_size
    sim_bytes = 2 * _sublane_granularity(sim_size) * tl * sim_size
    return dyn_bytes + out_bytes + cost_bytes + sim_bytes


def _choose_tiles(batch, row, dyn_size, out_size, cost_size, sim_size,
                  vmem_cap, num_cores):
    """Pick (TB, TL) for the flattened (batch, row) layout.

    Each block dim must be a multiple of (sublane, 128) or equal the full dim.
    Blocks target a few MiB (amortize ~0.35 us per grid step) and the total
    padding-aware, double-buffered footprint is kept under ~60% of physical VMEM.
    """
    sublane = _sublane_granularity(dyn_size)
    min_tb = min(sublane, batch)
    # ~1/16 of physical VMEM: 4 MiB on 64 MiB parts (v7x), 8 MiB on 128 MiB parts.
    target = max(2 << 20, min(8 << 20, vmem_cap // 16))

    # Lane (last-dim) tile: full row if min_tb rows of it fit in the target,
    # otherwise split into 128-multiples capped so min_tb rows stay <= target.
    if row * dyn_size * min_tb <= target or row <= 128:
        tl = row
    else:
        tl = max(128, (target // (min_tb * dyn_size)) // 128 * 128)
        tl = min(tl, max(128, (row // 128) * 128))

    # Sublane (batch) tile: as many sublane-aligned rows as fit in the target.
    rows_fit = max(1, target // (tl * dyn_size))
    if rows_fit >= batch:
        tb = batch
    else:
        tb = min(batch, max(min_tb, (rows_fit // sublane) * sublane))

    # Only force >=2 grid steps when the chip has multiple TensorCores (megacore);
    # on single-TC chips the grid is a serial loop and the split is pure overhead.
    if num_cores >= 2 and pl.cdiv(batch, tb) * pl.cdiv(row, tl) < 2:
        if tl == row and row >= 256:
            tl = max(128, ((row // 2) // 128) * 128)
        elif tb == batch and batch > min_tb:
            tb = min(batch, max(min_tb, ((batch // 2) // sublane) * sublane))

    # Shrink-to-fit: bound the real footprint (incl. padded static buffers) to
    # ~60% of physical VMEM, leaving headroom for Mosaic internal scratch.
    safe_cap = (vmem_cap * 3) // 5
    while _footprint_bytes(tb, tl, dyn_size, out_size, cost_size, sim_size) > safe_cap:
        if tl > 128:
            tl = max(128, ((tl // 2) // 128) * 128)
        elif tb > min_tb:
            tb = min(batch, max(min_tb, ((tb // 2) // sublane) * sublane))
        else:
            break
    return tb, tl


def fusion_adjacency_matrix(dynamic_adj_matrix, cost_adj_matrix,
                            similarity_adj_matrix, a, b, c, *, use_pallas=None):
    """Computes a*cost + b*dynamic + c*similarity, broadcasting cost/sim over batch."""
    B, N, M = dynamic_adj_matrix.shape
    assert cost_adj_matrix.shape == (N, M)
    assert similarity_adj_matrix.shape == (N, M)

    out_dtype = dynamic_adj_matrix.dtype
    if not jnp.issubdtype(out_dtype, jnp.floating):
        out_dtype = jnp.float32   # float parameters promote integer adjacency to f32

    a32 = jnp.asarray(a, jnp.float32)
    b32 = jnp.asarray(b, jnp.float32)
    c32 = jnp.asarray(c, jnp.float32)

    if use_pallas is None:
        use_pallas = dynamic_adj_matrix.size >= _PALLAS_MIN_ELEMENTS
    if not use_pallas:
        out = (a32 * cost_adj_matrix.astype(jnp.float32)
               + c32 * similarity_adj_matrix.astype(jnp.float32))[None]
        out = out + b32 * dynamic_adj_matrix.astype(jnp.float32)
        return out.astype(out_dtype)

    NM = N * M
    dyn2 = dynamic_adj_matrix.reshape(B, NM)       # lane-dense layout
    cost2 = cost_adj_matrix.reshape(1, NM)         # native dtype; cast in-kernel
    sim2 = similarity_adj_matrix.reshape(1, NM)
    coef = jnp.stack([a32, b32, c32])              # (3,) f32 -> SMEM scalar prefetch

    dyn_size = dyn2.dtype.itemsize
    out_size = jnp.dtype(out_dtype).itemsize
    cost_size = cost2.dtype.itemsize
    sim_size = sim2.dtype.itemsize

    vmem_cap, num_cores = _tpu_params()
    tb, tl = _choose_tiles(B, NM, dyn_size, out_size, cost_size, sim_size,
                           vmem_cap, num_cores)

    # Batch innermost: cost/sim block index is constant across consecutive steps,
    # so their VMEM buffers stay resident and are not re-DMA'd per batch tile.
    grid = (pl.cdiv(NM, tl), pl.cdiv(B, tb))

    budget = _footprint_bytes(tb, tl, dyn_size, out_size, cost_size, sim_size)
    vmem_limit = int(max(32 << 20, min(budget + (8 << 20), (vmem_cap * 3) // 4)))

    grid_spec = pltpu.PrefetchScalarGridSpec(
        num_scalar_prefetch=1,
        grid=grid,
        in_specs=[
            pl.BlockSpec((1, tl), lambda j, i, coef_ref: (0, j)),    # cost
            pl.BlockSpec((1, tl), lambda j, i, coef_ref: (0, j)),    # similarity
            pl.BlockSpec((tb, tl), lambda j, i, coef_ref: (i, j)),   # dynamic
        ],
        out_specs=pl.BlockSpec((tb, tl), lambda j, i, coef_ref: (i, j)),
    )

    bytes_accessed = B * NM * (dyn_size + out_size) + NM * (cost_size + sim_size)
    cost_est = pl.CostEstimate(flops=5 * B * NM, transcendentals=0,
                               bytes_accessed=bytes_accessed)

    out2 = pl.pallas_call(
        _fusion_kernel,
        out_shape=jax.ShapeDtypeStruct((B, NM), out_dtype),
        grid_spec=grid_spec,
        compiler_params=pltpu.CompilerParams(
            dimension_semantics=("parallel", "parallel"),
            vmem_limit_bytes=vmem_limit),
        cost_estimate=cost_est,
    )(coef, cost2, sim2, dyn2)

    return out2.reshape(B, N, M)


if __name__ == "__main__":
    key = jax.random.PRNGKey(0)

    def run_case(B, N):
        k1, k2, k3 = jax.random.split(jax.random.fold_in(key, 1000 * N + B), 3)
        cost_adj = jax.random.uniform(k1, (N, N), dtype=jnp.float32)
        sim_adj = jax.random.uniform(k2, (N, N), dtype=jnp.float32)
        dyn_adj = jax.random.uniform(k3, (B, N, N), dtype=jnp.float32)

        # nn.Parameter(torch.tensor(1.0)) x3 — deterministic init
        a = jnp.float32(1.0)
        b = jnp.float32(1.0)
        c = jnp.float32(1.0)

        out = fusion_adjacency_matrix(dyn_adj, cost_adj, sim_adj, a, b, c,
                                      use_pallas=True)
        out = jax.block_until_ready(out)

        ref = a * cost_adj[None] + b * dyn_adj + c * sim_adj[None]
        assert out.shape == (B, N, N)
        assert jnp.allclose(out, ref, atol=1e-5, rtol=1e-5), f"mismatch B={B} N={N}"

    run_case(2, 16)     # module's tiny shape, forced through the Pallas kernel
    run_case(8, 128)    # moderate shape exercising the batch/lane tiling path
    run_case(4, 256)    # multi-step grid: static blocks stay resident across batch
    print("KERNEL_OK")
</pallas_src>

<mosaic_0001>
module attributes {stable_mosaic.version = 11 : i64} {
  func.func @_fusion_kernel(%arg0: i32, %arg1: i32, %arg2: memref<3xf32, #tpu.memory_space<smem>>, %arg3: memref<1x256xf32, #tpu.memory_space<vmem>>, %arg4: memref<1x256xf32, #tpu.memory_space<vmem>>, %arg5: memref<2x256xf32, #tpu.memory_space<vmem>>, %arg6: memref<2x256xf32, #tpu.memory_space<vmem>>) attributes {dimension_semantics = [#tpu.dimension_semantics<parallel>, #tpu.dimension_semantics<parallel>], iteration_bounds = array<i64: 1, 1>, scalar_prefetch = 1 : i64, scratch_operands = 0 : i64, tpu.core_type = #tpu.core_type<tc>, window_params = [{transform_indices = @transform_0, window_bounds = array<i64: 1, 256>}, {transform_indices = @transform_1, window_bounds = array<i64: 1, 256>}, {transform_indices = @transform_2, window_bounds = array<i64: 2, 256>}, {transform_indices = @transform_3, window_bounds = array<i64: 2, 256>}]} {
    %c0 = arith.constant 0 : index
    %0 = memref.load %arg2[%c0] : memref<3xf32, #tpu.memory_space<smem>>
    %c1 = arith.constant 1 : index
    %1 = memref.load %arg2[%c1] : memref<3xf32, #tpu.memory_space<smem>>
    %c2 = arith.constant 2 : index
    %2 = memref.load %arg2[%c2] : memref<3xf32, #tpu.memory_space<smem>>
    %c0_0 = arith.constant 0 : index
    %c0_1 = arith.constant 0 : index
    %3 = vector.load %arg3[%c0_0, %c0_1] : memref<1x256xf32, #tpu.memory_space<vmem>>, vector<1x256xf32>
    %4 = vector.broadcast %0 : f32 to vector<1x256xf32>
    %5 = arith.mulf %4, %3 : vector<1x256xf32>
    %c0_2 = arith.constant 0 : index
    %c0_3 = arith.constant 0 : index
    %6 = vector.load %arg4[%c0_2, %c0_3] : memref<1x256xf32, #tpu.memory_space<vmem>>, vector<1x256xf32>
    %7 = vector.broadcast %2 : f32 to vector<1x256xf32>
    %8 = arith.mulf %7, %6 : vector<1x256xf32>
    %9 = arith.addf %5, %8 : vector<1x256xf32>
    %c0_4 = arith.constant 0 : index
    %c0_5 = arith.constant 0 : index
    %10 = vector.load %arg5[%c0_4, %c0_5] : memref<2x256xf32, #tpu.memory_space<vmem>>, vector<2x256xf32>
    %11 = vector.broadcast %1 : f32 to vector<2x256xf32>
    %12 = arith.mulf %11, %10 : vector<2x256xf32>
    %13 = vector.broadcast %9 : vector<1x256xf32> to vector<2x256xf32>
    %14 = arith.addf %13, %12 : vector<2x256xf32>
    %c0_6 = arith.constant 0 : index
    %c0_7 = arith.constant 0 : index
    %15 = vector.load %arg6[%c0_6, %c0_7] : memref<2x256xf32, #tpu.memory_space<vmem>>, vector<2x256xf32>
    tpu.vector_store %arg6[%c0_6, %c0_7], %14 {strides = array<i32>} : memref<2x256xf32, #tpu.memory_space<vmem>>, vector<2x256xf32>,
    return
  }
  func.func @transform_0(%arg0: i32, %arg1: i32, %arg2: memref<3xf32, #tpu.memory_space<smem>>) -> (i32, i32) {
    %c0_i32 = arith.constant 0 : i32
    %c0_i32_0 = arith.constant 0 : i32
    return %c0_i32, %arg0 : i32, i32
  }
  func.func @transform_1(%arg0: i32, %arg1: i32, %arg2: memref<3xf32, #tpu.memory_space<smem>>) -> (i32, i32) {
    %c0_i32 = arith.constant 0 : i32
    %c0_i32_0 = arith.constant 0 : i32
    return %c0_i32, %arg0 : i32, i32
  }
  func.func @transform_2(%arg0: i32, %arg1: i32, %arg2: memref<3xf32, #tpu.memory_space<smem>>) -> (i32, i32) {
    %c0_i32 = arith.constant 0 : i32
    return %arg1, %arg0 : i32, i32
  }
  func.func @transform_3(%arg0: i32, %arg1: i32, %arg2: memref<3xf32, #tpu.memory_space<smem>>) -> (i32, i32) {
    %c0_i32 = arith.constant 0 : i32
    return %arg1, %arg0 : i32, i32
  }
}

</mosaic_0001>

<llo_original>
// kernel: tpu_custom_call.1
$region0: #{tpu_custom_call.1}
  #allocation0 [shape = 'u32[]', space=smem, size = 0x4, offset = 0x4, fixed_abs, tag = 'smem constant byte address 0x4 - core index']
  #allocation1 [shape = 'u32[144,128]{1,0:T(1,128)}', space=vmem, size = 0x12000, scoped, tag = 'internal scratch']
  #allocation2 [shape = 's32[1]{0}', space=sflag, size = 0x4, scoped, tag = 'scoped memory for tpu_custom_call.1']
  #allocation3 [shape = 'u8[512]{0}', space=smem, size = 0x200, scoped, tag = 'prefetched SMEM operand 0']
  %s0 = inlined_call_operand.hbm [shape: f32[3], index: 0, kind: input, shape index: {}]
  %s1 = inlined_call_operand.vmem [shape: f32[1,256], index: 1, kind: input, shape index: {}]
  %s2 = inlined_call_operand.hbm [shape: f32[1,256], index: 2, kind: input, shape index: {}]
  %s3 = inlined_call_operand.vmem [shape: f32[2,256], index: 3, kind: input, shape index: {}]
  %s4 = inlined_call_operand.hbm [shape: f32[2,256], index: 4, kind: output, shape index: {}]
  %s5 = sld [smem:[#allocation0]]
  $region26: #{tpu_custom_call.1} parent=0
    _
  %s7 = ssub.s32 1, %s5
  %s8 = scalar_select 0, %s7, %s5
  %10 = dma.hbm_to_smem %s0, 16, [#allocation3], [#allocation2]
  %11 = dma.done [#allocation2], 16
  %12 = sfence
  $region1: #{tpu_custom_call.1} parent=0
    #allocation4 [shape = 'u8[1024]{0}', space=vmem, size = 0x400, scoped, tag = 'input window, operand 2, single buffered']
    #allocation5 [shape = 's32[1]{0}', space=sflag, size = 0x4, scoped, tag = 'scoped memory for tpu_custom_call.1']
    #allocation6 [shape = 's32[1]{0}', space=sflag, size = 0x4, scoped, tag = 'scoped memory for tpu_custom_call.1']
    #allocation7 [shape = 'u8[2048]{0}', space=vmem, size = 0x800, scoped, tag = 'output window, operand 0, single buffered']
    %13 = vsyncpa [#allocation5], 0
    %14 = vsyncpa [#allocation6], 0
    // Predicated region
    $region2: #{tpu_custom_call.1} parent=1 // pred_check
      _
    $region3: #{tpu_custom_call.1} parent=1 // pred_check_branch
      %16 = sbr.rel (0) target = $region5
    $region4: #{tpu_custom_call.1} parent=1 // pred_region
      _
    $region5: #{tpu_custom_call.1} parent=1 // pred_fallthru
      _
    // Predicated region
    $region6: #{tpu_custom_call.1} parent=1 // pred_check
      _
    $region7: #{tpu_custom_call.1} parent=1 // pred_check_branch
      %18 = sbr.rel (0) target = $region9
    $region8: #{tpu_custom_call.1} parent=1 // pred_region
      %s20 = ssub.s32 32, 32
      %21 = vsyncadd [#allocation5], %s20
      %s23 = sshll.u32 [#allocation4], 4
      %s24 = int_to_ptr.vmem [resolvable:$true] %s23
      %26 = dma.hbm_to_vmem [thread:$0]  %s2, 32, %s24, [#allocation5]
    $region9: #{tpu_custom_call.1} parent=1 // pred_fallthru
      _
    // Predicated region
    $region10: #{tpu_custom_call.1} parent=1 // pred_check
      _
    $region11: #{tpu_custom_call.1} parent=1 // pred_check_branch
      %28 = sbr.rel (0) target = $region13
    $region12: #{tpu_custom_call.1} parent=1 // pred_region
      _
    $region13: #{tpu_custom_call.1} parent=1 // pred_fallthru
      _
    // Predicated region
    $region14: #{tpu_custom_call.1} parent=1 // pred_check
      _
    $region15: #{tpu_custom_call.1} parent=1 // pred_check_branch
      %30 = sbr.rel (0) target = $region17
    $region16: #{tpu_custom_call.1} parent=1 // pred_region
      %31 = dma.done [#allocation5], 32
    $region17: #{tpu_custom_call.1} parent=1 // pred_fallthru
      _
    %s32 = sld [smem:[#allocation3]]
    %s33 = sld [smem:[#allocation3 + $0x1]]
    %s34 = sld [smem:[#allocation3 + $0x2]]
    %v35 = vld [vmem:[%s1] sm:$0x3]
    %v36 = vstv %s32
    %v37 = vmul.f32 %v36, %v35
    %v38 = vld [vmem:[#allocation4] sm:$0x3]
    %v39 = vstv %s34
    %v40 = vmul.f32 %v39, %v38
    %v41 = vadd.f32 %v37, %v40
    %v42 = vld [vmem:[%s3] sm:$0xf]
    %v43 = vstv %s33
    %v44 = vmul.f32 %v43, %v42
    %v46 = vlaneseq
    %v47 = vshrl.u32 %v46, 7
    %v48 = vsub.s32 0, %v47
    %v49 = vrot.slane %v41, %v48
    %v50 = vlaneseq
    %v51 = vshrl.u32 %v50, 7
    %v52 = vsub.s32 1, %v51
    %v53 = vrot.slane %v41, %v52
    %v58 = vunpack.c.l.s4 1983009808
    %v59 = vunpack.c.0.s8 %v58
    %v60 = vlaneseq
    %v61 = vshrl.u32 %v60, 7
    %v62 = vsub.s32 %v59, %v61
    %v63 = vrot.slane %v44, %v62
    %v64 = vcombine.high %v63, %v63
    %v67 = vadd.f32 %v49, %v63
    %v68 = vadd.f32 %v53, %v64
    %v71 = vcombine.low %v67, %v68
    %v73 = vunpack.c.l.s4 1983009808
    %v74 = vunpack.c.0.s8 %v73
    %v75 = vlaneseq
    %v76 = vshrl.u32 %v75, 7
    %v77 = vsub.s32 %v74, %v76
    %v78 = vrot.slane %v71, %v77
    %80 = vst [vmem:[#allocation7] sm:$0xf] %v78
    // Predicated region
    $region18: #{tpu_custom_call.1} parent=1 // pred_check
      _
    $region19: #{tpu_custom_call.1} parent=1 // pred_check_branch
      %82 = sbr.rel (0) target = $region21
    $region20: #{tpu_custom_call.1} parent=1 // pred_region
      %s84 = ssub.s32 64, 64
      %85 = vsyncadd [#allocation6], %s84
      %s87 = sshll.u32 [#allocation7], 4
      %s88 = int_to_ptr.vmem [resolvable:$true] %s87
      %90 = dma.vmem_to_hbm [thread:$0]  %s88, 64, %s4, [#allocation6]
    $region21: #{tpu_custom_call.1} parent=1 // pred_fallthru
      _
    // Predicated region
    $region22: #{tpu_custom_call.1} parent=1 // pred_check
      _
    $region23: #{tpu_custom_call.1} parent=1 // pred_check_branch
      %92 = sbr.rel (0) target = $region25
    $region24: #{tpu_custom_call.1} parent=1 // pred_region
      %93 = dma.done [#allocation6], 64
    $region25: #{tpu_custom_call.1} parent=1 // pred_fallthru
      _
    %94 = vsyncpa [#allocation5], 1
    %95 = vsyncpa [#allocation6], 1

</llo_original>
